<compile_context>
chip_gen: v7x
topology: tpu7x:2x2x1
jax: 0.10.0
libtpu: 0.0.40
codegen_flags: <defaults>
</compile_context>

<pallas_src>
import functools

import jax
import jax.numpy as jnp
from jax.experimental import pallas as pl
from jax.experimental.pallas import tpu as pltpu


def _round_up(x: int, m: int) -> int:
    return (x + m - 1) // m * m


_TM_LADDER = (16, 32, 64, 128, 256)


def _pick_tm(m: int) -> int:
    """Fixed row-tile ladder: bounds recompiles, avoids >1-tile pad waste."""
    for t in _TM_LADDER:
        if m <= t:
            return t
    return _TM_LADDER[-1]


def _linear_bias_kernel(x_ref, w_ref, b_ref, o_ref, *, compute_dtype):
    """o = x @ w + b for one (tm x K) row tile and one 128-lane output half.

    Single-step K (whole contraction resident in VMEM), f32 MXU accumulate,
    fused bias epilogue.  x is cast to the compute dtype in-register so the
    HBM input can stay f32 while the matmul runs on the bf16 MXU path.
    """
    x = x_ref[...]
    if x.dtype != compute_dtype:
        x = x.astype(compute_dtype)
    o_ref[...] = (
        jnp.dot(x, w_ref[...], preferred_element_type=jnp.float32) + b_ref[...]
    ).astype(o_ref.dtype)


@functools.partial(jax.jit, static_argnames=("tm", "out_dtype", "compute_dtype"))
def _linear_pallas(x2d, w_t, b2d, *, tm, out_dtype, compute_dtype):
    M, K = x2d.shape
    Kw, N = w_t.shape
    assert Kw == K, (Kw, K)

    # Split N into 128-lane halves so the grid always has >= 2 parallel steps
    # (v7x megacore: each TC moves only half the weight bytes).
    n_split = 2 if (N % 256 == 0) else 1
    tn = N // n_split
    grid = (pl.cdiv(M, tm), n_split)

    kernel = functools.partial(_linear_bias_kernel, compute_dtype=compute_dtype)

    return pl.pallas_call(
        kernel,
        out_shape=jax.ShapeDtypeStruct((M, N), out_dtype),
        grid_spec=pltpu.PrefetchScalarGridSpec(
            num_scalar_prefetch=0,
            grid=grid,
            in_specs=[
                # x row tile; constant in j so it is not re-fetched across the
                # two N halves (N is the inner, fastest grid axis).
                pl.BlockSpec((tm, K), lambda i, j: (i, 0)),
                # W^T 128-lane half, selected by j.  K equals the full array
                # dim (512 or 528), so the 128-divisibility rule is satisfied
                # (528 is sublane-aligned: 528 % 8 == 0).
                pl.BlockSpec((K, tn), lambda i, j: (0, j)),
                # bias half.
                pl.BlockSpec((1, tn), lambda i, j: (0, j)),
            ],
            # 128-lane-wide output block -> unmasked full-width vector stores.
            out_specs=pl.BlockSpec((tm, tn), lambda i, j: (i, j)),
        ),
        compiler_params=pltpu.CompilerParams(
            dimension_semantics=("parallel", "parallel"),
        ),
    )(x2d, w_t, b2d)


class PanelsToEmbeddings:
    """JAX/Pallas port of the PyTorch module `panels_to_embeddings`."""

    SUBLANE = 8  # K stored sublane-aligned (521 -> 528 on the tag path)

    def __init__(self, tag: bool, key: jax.Array, dtype=jnp.float32,
                 use_bf16: bool = True):
        self.in_dim = 512 + (9 if tag else 0)
        self.out_dim = 256
        # K pad only to a sublane multiple (528, not 640) -> fewer W bytes.
        self.k_store = _round_up(self.in_dim, self.SUBLANE)

        kw, kb = jax.random.split(key)
        # deterministic init mimicking nn.Linear's uniform(-1/sqrt(in), 1/sqrt(in))
        bound = 1.0 / float(self.in_dim) ** 0.5
        # PyTorch stores weight as (out, in); keep that convention for parity.
        self.weight = jax.random.uniform(
            kw, (self.out_dim, self.in_dim), dtype, -bound, bound
        )
        self.bias = jax.random.uniform(kb, (self.out_dim,), dtype, -bound, bound)

        # bf16 compute halves the dominant weight DMA; MXU still accumulates
        # in f32.  use_bf16=False keeps exact f32 math (1e-4 parity check).
        self._compute_dtype = jnp.bfloat16 if use_bf16 else jnp.float32

        # Pre-transpose, cast and K-pad the weight ONCE (no per-call HBM
        # transpose/pad of the ~0.25-0.5 MiB weight).
        w_t = jnp.transpose(self.weight).astype(self._compute_dtype)  # (in, 256)
        if self.k_store != self.in_dim:
            w_t = jnp.pad(w_t, ((0, self.k_store - self.in_dim), (0, 0)))
        self._w_t = w_t
        self._b2d = self.bias.reshape(1, self.out_dim).astype(jnp.float32)

    def __call__(self, x):
        out_dtype = x.dtype
        x2d = jnp.reshape(x, (-1, self.in_dim))
        m = x2d.shape[0]

        # Tag path only: zero-pad K 521 -> 528 (7 cols, ~1.3% extra bytes) so
        # it matches the stored W^T.  tag=False (K=512) takes no copy at all.
        pad_k = self.k_store - self.in_dim
        if pad_k:
            x2d = jnp.pad(x2d, ((0, 0), (0, pad_k)))

        # No M padding: cdiv grid with a partial last block; padded rows of
        # the x tile are undefined but only feed output rows that are never
        # written back (no reduction over M inside the kernel).
        tm = _pick_tm(m)
        return _linear_pallas(
            x2d, self._w_t, self._b2d,
            tm=tm, out_dtype=out_dtype, compute_dtype=self._compute_dtype,
        )


if __name__ == "__main__":
    key = jax.random.PRNGKey(0)
    k_param, k_x = jax.random.split(key)

    # --- default path: tag=False (K=512), bf16 weights, 2x16 panels --------
    model = PanelsToEmbeddings(False, k_param)           # use_bf16=True default
    x = jax.random.normal(k_x, (2, 16, model.in_dim), jnp.float32)
    out = jax.block_until_ready(model(x))
    assert out.shape == (2 * 16, 256), out.shape
    ref = x.reshape(-1, model.in_dim) @ model.weight.T + model.bias
    assert jnp.allclose(out, ref, atol=3e-2, rtol=3e-2), \
        float(jnp.max(jnp.abs(out - ref)))

    # partial-M-block path (m=80 < tm=128) on the same bf16 model
    x_big = jax.random.normal(k_x, (5, 16, model.in_dim), jnp.float32)
    out_big = jax.block_until_ready(model(x_big))
    ref_big = x_big.reshape(-1, model.in_dim) @ model.weight.T + model.bias
    assert out_big.shape == (5 * 16, 256)
    assert jnp.allclose(out_big, ref_big, atol=3e-2, rtol=3e-2)

    # --- exact f32 path: tag=True (K=521 -> 528), 3x16 panels, 1e-4 check ---
    model_f32 = PanelsToEmbeddings(True, k_param, use_bf16=False)
    xt = jax.random.normal(k_x, (3, 16, model_f32.in_dim), jnp.float32)
    out_f32 = jax.block_until_ready(model_f32(xt))
    assert out_f32.shape == (3 * 16, 256), out_f32.shape
    ref_f32 = xt.reshape(-1, model_f32.in_dim) @ model_f32.weight.T + model_f32.bias
    assert jnp.allclose(out_f32, ref_f32, atol=1e-4, rtol=1e-4)

    # --- bf16 + tag path, checked against a matching bf16/f32-acc reference -
    model_bf = PanelsToEmbeddings(True, k_param)
    out_bf = jax.block_until_ready(model_bf(xt))
    xt2 = xt.reshape(-1, model_bf.in_dim)
    ref_bf = jnp.dot(xt2.astype(jnp.bfloat16),
                     model_bf.weight.T.astype(jnp.bfloat16),
                     preferred_element_type=jnp.float32) + model_bf.bias
    assert jnp.allclose(out_bf, ref_bf, atol=2e-2, rtol=2e-2)

    print("KERNEL_OK")
</pallas_src>

<mosaic_0001>
module attributes {stable_mosaic.version = 11 : i64} {
  func.func @_linear_bias_kernel(%arg0: i32, %arg1: i32, %arg2: memref<32x512xf32, #tpu.memory_space<vmem>>, %arg3: memref<512x128xbf16, #tpu.memory_space<vmem>>, %arg4: memref<1x128xf32, #tpu.memory_space<vmem>>, %arg5: memref<32x128xf32, #tpu.memory_space<vmem>>) attributes {dimension_semantics = [#tpu.dimension_semantics<parallel>, #tpu.dimension_semantics<parallel>], iteration_bounds = array<i64: 1, 2>, scalar_prefetch = 0 : i64, scratch_operands = 0 : i64, tpu.core_type = #tpu.core_type<tc>, window_params = [{transform_indices = @transform_0, window_bounds = array<i64: 32, 512>}, {transform_indices = @transform_1, window_bounds = array<i64: 512, 128>}, {transform_indices = @transform_2, window_bounds = array<i64: 1, 128>}, {transform_indices = @transform_3, window_bounds = array<i64: 32, 128>}]} {
    %c0 = arith.constant 0 : index
    %c0_0 = arith.constant 0 : index
    %0 = vector.load %arg2[%c0, %c0_0] : memref<32x512xf32, #tpu.memory_space<vmem>>, vector<32x512xf32>
    %1 = arith.truncf %0 : vector<32x512xf32> to vector<32x512xbf16>
    %c0_1 = arith.constant 0 : index
    %c0_2 = arith.constant 0 : index
    %2 = vector.load %arg3[%c0_1, %c0_2] : memref<512x128xbf16, #tpu.memory_space<vmem>>, vector<512x128xbf16>
    %cst = arith.constant dense<0.000000e+00> : vector<32x128xf32>
    %3 = tpu.matmul %1, %2, %cst {dimension_numbers = #tpu.dot_dimension_numbers<[1], [0], [0], [1], [0, 0, 1, 1], [], []>} : vector<32x512xbf16>, vector<512x128xbf16>, vector<32x128xf32> -> vector<32x128xf32>
    %c0_3 = arith.constant 0 : index
    %c0_4 = arith.constant 0 : index
    %4 = vector.load %arg4[%c0_3, %c0_4] : memref<1x128xf32, #tpu.memory_space<vmem>>, vector<1x128xf32>
    %5 = vector.broadcast %4 : vector<1x128xf32> to vector<32x128xf32>
    %6 = arith.addf %3, %5 : vector<32x128xf32>
    %c0_5 = arith.constant 0 : index
    %c0_6 = arith.constant 0 : index
    %7 = vector.load %arg5[%c0_5, %c0_6] : memref<32x128xf32, #tpu.memory_space<vmem>>, vector<32x128xf32>
    tpu.vector_store %arg5[%c0_5, %c0_6], %6 {strides = array<i32>} : memref<32x128xf32, #tpu.memory_space<vmem>>, vector<32x128xf32>,
    return
  }
  func.func @transform_0(%arg0: i32, %arg1: i32) -> (i32, i32) {
    %c0_i32 = arith.constant 0 : i32
    %c0_i32_0 = arith.constant 0 : i32
    return %arg0, %c0_i32 : i32, i32
  }
  func.func @transform_1(%arg0: i32, %arg1: i32) -> (i32, i32) {
    %c0_i32 = arith.constant 0 : i32
    %c0_i32_0 = arith.constant 0 : i32
    return %c0_i32, %arg1 : i32, i32
  }
  func.func @transform_2(%arg0: i32, %arg1: i32) -> (i32, i32) {
    %c0_i32 = arith.constant 0 : i32
    %c0_i32_0 = arith.constant 0 : i32
    return %c0_i32, %arg1 : i32, i32
  }
  func.func @transform_3(%arg0: i32, %arg1: i32) -> (i32, i32) {
    %c0_i32 = arith.constant 0 : i32
    return %arg0, %arg1 : i32, i32
  }
}

</mosaic_0001>

<llo_original>
// kernel: _linear_pallas.1
$region0: #{_linear_pallas.1}
  #allocation0 [shape = 'u32[]', space=smem, size = 0x4, offset = 0x4, fixed_abs, tag = 'smem constant byte address 0x4 - core index']
  #allocation1 [shape = 'u32[144,128]{1,0:T(1,128)}', space=vmem, size = 0x12000, scoped, tag = 'internal scratch']
  %s0 = inlined_call_operand.hbm [shape: f32[32,512], index: 0, kind: input, shape index: {}]
  %s1 = inlined_call_operand.hbm [shape: bf16[512,256], index: 1, kind: input, shape index: {}]
  %s2 = inlined_call_operand.vmem [shape: f32[1,256], index: 2, kind: input, shape index: {}]
  %s3 = inlined_call_operand.hbm [shape: f32[32,256], index: 3, kind: output, shape index: {}]
  %s4 = sld [smem:[#allocation0]]
  $region53: #{_linear_pallas.1} parent=0
    _
  %s6 = ssub.s32 1, %s4
  %s7 = scalar_select 0, %s6, %s4
  $region1: #{_linear_pallas.1} parent=0
    #allocation2 [shape = 'u8[65536]{0}', space=vmem, size = 0x10000, scoped, tag = 'input window, operand 0, single buffered']
    #allocation3 [shape = 's32[2]{0}', space=sflag, size = 0x8, scoped, tag = 'scoped memory for _linear_pallas.1']
    #allocation4 [shape = 's32[2]{0}', space=sflag, size = 0x8, scoped, tag = 'scoped memory for _linear_pallas.1']
    #allocation5 [shape = 'u8[262144]{0}', space=vmem, size = 0x40000, scoped, tag = 'input window, operand 1']
    #allocation6 [shape = 's32[2]{0}', space=sflag, size = 0x8, scoped, tag = 'scoped memory for _linear_pallas.1']
    #allocation7 [shape = 'u8[32768]{0}', space=vmem, size = 0x8000, scoped, tag = 'output window, operand 0']
    %8 = vsyncpa [#allocation3], 0
    %9 = vsyncpa [#allocation6], 0
    %s10 = scalar_lea.sflag [#allocation6], 1
    %11 = vsyncpa %s10, 0
    %12 = vsyncpa [#allocation4], 0
    %s13 = scalar_lea.sflag [#allocation4], 1
    %14 = vsyncpa %s13, 0
    loop: start=0, step=1, limit=4
    $region2: #{_linear_pallas.1} parent=1 // loop_pre_header
      _
    $region3: #{_linear_pallas.1} parent=1 // loop_header
      %s16 = sphi 0, %s20
      %p17 = scmp.ge.s32.totalorder %s16, 4
      %s23 = sphi 0, %s35
      %s24 = sphi 0, %s31
      %s25 = sphi 0, %s23
      %s26 = sphi 0, %s24
      %s27 = sphi 0, %s25
      %s28 = sphi 0, %s26
      %s38 = sphi 0, %s40
      %s41 = sphi 0, %s38
      %s42 = sphi 0, %s41
      %s58 = sphi 0, %s42
      %s64 = sphi 0, %s66
      %s67 = sphi 0, %s64
      %s68 = sphi 0, %s67
      %s84 = sphi 0, %s68
      %s90 = sphi 0, %s92
      %s93 = sphi 0, %s90
      %s94 = sphi 0, %s93
      %s110 = sphi 0, %s94
      %s118 = sphi 0, %s120
      %s121 = sphi 0, %s118
      %s122 = sphi 0, %s121
      %s138 = sphi 0, %s122
    $region4: #{_linear_pallas.1} parent=1 // loop_header_branch
      %19 = sbr.rel (%p17) target = $region8
    $region5: #{_linear_pallas.1} parent=1 // loop_body
      %s21 = ssub.s32 %s16, 1
      %s22 = ssub.s32 %s16, 2
      %s29 = sadd.s32 1, %s24
      %p30 = scmp.ge.s32.totalorder %s29, 2
      %s31 = scalar_select %p30, 0, %s29
      %s32 = sadd.s32 1, %s23
      %s33 = scalar_select %p30, %s32, %s23
      %p34 = scmp.ge.s32.totalorder %s33, 1
      %s35 = scalar_select %p34, 0, %s33
      %s36 = ssub.s32 %s23, %s35
      %p37 = scmp.eq.s32.totalorder %s36, 0
      %s39 = sadd.s32 %s38, 1
      %s40 = scalar_select %p37, %s38, %s39
      %p43 = pneg %p37
      %p44 = scmp.eq.s32.totalorder %s16, 1
      %p45 = por %p43, %p44
      %p46 = scmp.ne.s32.totalorder %s38, %s41
      %p47 = scmp.eq.s32.totalorder %s16, 0
      %p48 = por %p46, %p47
      %p49 = scmp.ne.s32.totalorder %s38, %s41
      %p50 = scmp.eq.s32.totalorder %s21, 1
      %p51 = por %p49, %p50
      %p52 = scmp.ne.s32.totalorder %s41, %s42
      %p53 = scmp.eq.s32.totalorder %s21, 0
      %p54 = por %p52, %p53
      %p55 = scmp.ne.s32.totalorder %s41, %s42
      %p56 = scmp.eq.s32.totalorder %s22, 1
      %p57 = por %p55, %p56
      %p59 = scmp.ne.s32.totalorder %s42, %s58
      %p60 = scmp.eq.s32.totalorder %s22, 0
      %p61 = por %p59, %p60
      %s62 = ssub.s32 %s24, %s31
      %p63 = scmp.eq.s32.totalorder %s62, 0
      %s65 = sadd.s32 %s64, 1
      %s66 = scalar_select %p63, %s64, %s65
      %p69 = pneg %p63
      %p70 = scmp.eq.s32.totalorder %s16, 1
      %p71 = por %p69, %p70
      %p72 = scmp.ne.s32.totalorder %s64, %s67
      %p73 = scmp.eq.s32.totalorder %s16, 0
      %p74 = por %p72, %p73
      %p75 = scmp.ne.s32.totalorder %s64, %s67
      %p76 = scmp.eq.s32.totalorder %s21, 1
      %p77 = por %p75, %p76
      %p78 = scmp.ne.s32.totalorder %s67, %s68
      %p79 = scmp.eq.s32.totalorder %s21, 0
      %p80 = por %p78, %p79
      %p81 = scmp.ne.s32.totalorder %s67, %s68
      %p82 = scmp.eq.s32.totalorder %s22, 1
      %p83 = por %p81, %p82
      %p85 = scmp.ne.s32.totalorder %s68, %s84
      %p86 = scmp.eq.s32.totalorder %s22, 0
      %p87 = por %p85, %p86
      %s88 = ssub.s32 %s24, %s31
      %p89 = scmp.eq.s32.totalorder %s88, 0
      %s91 = sadd.s32 %s90, 1
      %s92 = scalar_select %p89, %s90, %s91
      %p95 = pneg %p89
      %p96 = scmp.eq.s32.totalorder %s16, 1
      %p97 = por %p95, %p96
      %p98 = scmp.ne.s32.totalorder %s90, %s93
      %p99 = scmp.eq.s32.totalorder %s16, 0
      %p100 = por %p98, %p99
      %p101 = scmp.ne.s32.totalorder %s90, %s93
      %p102 = scmp.eq.s32.totalorder %s21, 1
      %p103 = por %p101, %p102
      %p104 = scmp.ne.s32.totalorder %s93, %s94
      %p105 = scmp.eq.s32.totalorder %s21, 0
      %p106 = por %p104, %p105
      %p107 = scmp.ne.s32.totalorder %s93, %s94
      %p108 = scmp.eq.s32.totalorder %s22, 1
      %p109 = por %p107, %p108
      %p111 = scmp.ne.s32.totalorder %s94, %s110
      %p112 = scmp.eq.s32.totalorder %s22, 0
      %p113 = por %p111, %p112
      %s114 = ssub.s32 %s23, %s35
      %s115 = ssub.s32 %s24, %s31
      %s116 = sor.u32 %s114, %s115
      %p117 = scmp.eq.s32.totalorder %s116, 0
      %s119 = sadd.s32 %s118, 1
      %s120 = scalar_select %p117, %s118, %s119
      %p123 = pneg %p117
      %p124 = scmp.eq.s32.totalorder %s16, 1
      %p125 = por %p123, %p124
      %p126 = scmp.ne.s32.totalorder %s118, %s121
      %p127 = scmp.eq.s32.totalorder %s16, 0
      %p128 = por %p126, %p127
      %p129 = scmp.ne.s32.totalorder %s118, %s121
      %p130 = scmp.eq.s32.totalorder %s21, 1
      %p131 = por %p129, %p130
      %p132 = scmp.ne.s32.totalorder %s121, %s122
      %p133 = scmp.eq.s32.totalorder %s21, 0
      %p134 = por %p132, %p133
      %p135 = scmp.ne.s32.totalorder %s121, %s122
      %p136 = scmp.eq.s32.totalorder %s22, 1
      %p137 = por %p135, %p136
      %p139 = scmp.ne.s32.totalorder %s122, %s138
      %p140 = scmp.eq.s32.totalorder %s22, 0
      %p141 = por %p139, %p140
      %p142 = scmp.le.s32.totalorder 1, %s16
      %p143 = scmp.lt.s32.totalorder %s16, 3
      %p144 = pnand %p142, %p143
      %p145 = pneg %p144
      // Predicated region
      $region9: #{_linear_pallas.1} parent=5 // pred_check
        _
      $region10: #{_linear_pallas.1} parent=5 // pred_check_branch
        %147 = sbr.rel (%p144) target = $region12
      $region11: #{_linear_pallas.1} parent=5 // pred_region
        %s148 = ssub.s32 %s16, 1
        // Predicated region
        $region13: #{_linear_pallas.1} parent=11 // pred_check
          %p149 = pneg %p54
        $region14: #{_linear_pallas.1} parent=11 // pred_check_branch
          %151 = sbr.rel (%p149) target = $region16
        $region15: #{_linear_pallas.1} parent=11 // pred_region
          %s152 = smul.u32 4, %s25
          %s154 = ssub.s32 2048, 2048
          %155 = vsyncadd [#allocation3], %s154
          %s156 = smul.addr %s152, 4
          %s157 = smul.addr %s156, 128
          %s158 = scalar_lea.hbm %s0, %s157
          %s159 = sshll.u32 [#allocation2], 4
          %s160 = int_to_ptr.vmem [resolvable:$true] %s159
          %165 = dma.hbm_to_vmem [thread:$0]  %s158, 2048, %s160, [#allocation3], 512, 512, 32
        $region16: #{_linear_pallas.1} parent=11 // pred_fallthru
          _
      $region12: #{_linear_pallas.1} parent=5 // pred_fallthru
        _
      %p166 = scmp.lt.s32.totalorder %s16, 2
      // Predicated region
      $region17: #{_linear_pallas.1} parent=5 // pred_check
        %p167 = pneg %p166
      $region18: #{_linear_pallas.1} parent=5 // pred_check_branch
        %169 = sbr.rel (%p167) target = $region20
      $region19: #{_linear_pallas.1} parent=5 // pred_region
        // Predicated region
        $region21: #{_linear_pallas.1} parent=19 // pred_check
          %p170 = pneg %p74
        $region22: #{_linear_pallas.1} parent=19 // pred_check_branch
          %172 = sbr.rel (%p170) target = $region24
        $region23: #{_linear_pallas.1} parent=19 // pred_region
          %s173 = sand.u32 %s64, 1
          %s174 = scalar_lea.sflag [#allocation6], %s173
          %s175 = sand.u32 %s64, 1
          %s176 = smul.addr %s175, 256
          %s177 = scalar_lea.vmem [#allocation5], %s176
          %s179 = ssub.s32 4096, 4096
          %180 = vsyncadd %s174, %s179
          %s181 = smul.addr %s24, 64
          %s182 = scalar_lea.hbm %s1, %s181
          %s183 = sshll.u32 %s177, 4
          %s184 = int_to_ptr.vmem [resolvable:$true] %s183
          %189 = dma.hbm_to_vmem [thread:$0]  %s182, 4096, %s184, %s174, 128, 64, 4
        $region24: #{_linear_pallas.1} parent=19 // pred_fallthru
          _
        // Predicated region
        $region25: #{_linear_pallas.1} parent=19 // pred_check
          %p190 = pneg %p100
        $region26: #{_linear_pallas.1} parent=19 // pred_check_branch
          %192 = sbr.rel (%p190) target = $region28
        $region27: #{_linear_pallas.1} parent=19 // pred_region
          %p193 = scmp.lt.s32.totalorder %s24, 1
          %s194 = scalar_select %p193, %s24, 1
          %s195 = scalar_lea.vmem %s2, %s194
        $region28: #{_linear_pallas.1} parent=19 // pred_fallthru
          _
      $region20: #{_linear_pallas.1} parent=5 // pred_fallthru
        _
      %p196 = scmp.le.s32.totalorder 1, %s16
      %p197 = scmp.lt.s32.totalorder %s16, 3
      %p198 = pnand %p196, %p197
      %p199 = pneg %p198
      // Predicated region
      $region29: #{_linear_pallas.1} parent=5 // pred_check
        _
      $region30: #{_linear_pallas.1} parent=5 // pred_check_branch
        %201 = sbr.rel (%p198) target = $region32
      $region31: #{_linear_pallas.1} parent=5 // pred_region
        %s202 = ssub.s32 %s16, 1
        // Predicated region
        $region33: #{_linear_pallas.1} parent=31 // pred_check
          %p203 = pneg %p54
        $region34: #{_linear_pallas.1} parent=31 // pred_check_branch
          %205 = sbr.rel (%p203) target = $region36
        $region35: #{_linear_pallas.1} parent=31 // pred_region
          %206 = dma.done [#allocation3], 2048
        $region36: #{_linear_pallas.1} parent=31 // pred_fallthru
          _
        %s207 = sand.u32 %s67, 1
        %s208 = scalar_lea.sflag [#allocation6], %s207
        %s209 = sand.u32 %s67, 1
        %s210 = smul.addr %s209, 256
        %s211 = scalar_lea.vmem [#allocation5], %s210
        // Predicated region
        $region37: #{_linear_pallas.1} parent=31 // pred_check
          %p212 = pneg %p80
        $region38: #{_linear_pallas.1} parent=31 // pred_check_branch
          %214 = sbr.rel (%p212) target = $region40
        $region39: #{_linear_pallas.1} parent=31 // pred_region
          %215 = dma.done %s208, 4096
        $region40: #{_linear_pallas.1} parent=31 // pred_fallthru
          _
        %p216 = pneg %p54
        %p217 = pneg %p51
        %s218 = sand.u32 %s67, 1
        %s219 = scalar_lea.sflag [#allocation6], %s218
        %s220 = sand.u32 %s67, 1
        %s221 = smul.addr %s220, 256
        %s222 = scalar_lea.vmem [#allocation5], %s221
        %p223 = pneg %p80
        %p224 = pneg %p77
        %p225 = scmp.lt.s32.totalorder %s26, 1
        %s226 = scalar_select %p225, %s26, 1
        %s227 = scalar_lea.vmem %s2, %s226
        %p228 = pneg %p106
        %p229 = pneg %p103
        %p230 = pneg %p134
        %p231 = pneg %p131
        %s232 = sand.u32 %s121, 1
        %s233 = scalar_lea.sflag [#allocation4], %s232
        %s234 = sand.u32 %s121, 1
        %s235 = smul.addr %s234, 32
        %s236 = scalar_lea.vmem [#allocation7], %s235
        %s237 = smul.u32 4, %s25
        %p238 = scmp.lt.s32.totalorder %s26, 1
        %s239 = scalar_select %p238, %s26, 1
        %s240 = scalar_lea.vmem %s2, %s239
        %s241 = smul.u32 4, %s25
        %v243 = vld [vmem:[#allocation2] sm:$0xff]
        %v244 = vld [vmem:[#allocation2 + $0x8] sm:$0xff]
        %v245 = vld [vmem:[#allocation2 + $0x10] sm:$0xff]
        %v246 = vld [vmem:[#allocation2 + $0x18] sm:$0xff]
        %v247 = vld [vmem:[#allocation2 + $0x20] sm:$0xff]
        %v248 = vld [vmem:[#allocation2 + $0x28] sm:$0xff]
        %v249 = vld [vmem:[#allocation2 + $0x30] sm:$0xff]
        %v250 = vld [vmem:[#allocation2 + $0x38] sm:$0xff]
        %v251 = vld [vmem:[#allocation2 + $0x40] sm:$0xff]
        %v252 = vld [vmem:[#allocation2 + $0x48] sm:$0xff]
        %v253 = vld [vmem:[#allocation2 + $0x50] sm:$0xff]
        %v254 = vld [vmem:[#allocation2 + $0x58] sm:$0xff]
        %v255 = vld [vmem:[#allocation2 + $0x60] sm:$0xff]
        %v256 = vld [vmem:[#allocation2 + $0x68] sm:$0xff]
        %v257 = vld [vmem:[#allocation2 + $0x70] sm:$0xff]
        %v258 = vld [vmem:[#allocation2 + $0x78] sm:$0xff]
        %v259 = vpack.c.bf16 %v247, %v243
        %v260 = vpack.c.bf16 %v248, %v244
        %v261 = vpack.c.bf16 %v249, %v245
        %v262 = vpack.c.bf16 %v250, %v246
        %v263 = vpack.c.bf16 %v255, %v251
        %v264 = vpack.c.bf16 %v256, %v252
        %v265 = vpack.c.bf16 %v257, %v253
        %v266 = vpack.c.bf16 %v258, %v254
        %v267 = vld [vmem:[%s211] sm:$0xf]
        %v268 = vld [vmem:[%s211 + $0x4] sm:$0xf]
        %v269 = vld [vmem:[%s211 + $0x8] sm:$0xf]
        %v270 = vld [vmem:[%s211 + $0xc] sm:$0xf]
        %v271 = vld [vmem:[%s211 + $0x10] sm:$0xf]
        %v272 = vld [vmem:[%s211 + $0x14] sm:$0xf]
        %v273 = vld [vmem:[%s211 + $0x18] sm:$0xf]
        %v274 = vld [vmem:[%s211 + $0x1c] sm:$0xf]
        %v275 = vld [vmem:[%s211 + $0x20] sm:$0xf]
        %v276 = vld [vmem:[%s211 + $0x24] sm:$0xf]
        %v277 = vld [vmem:[%s211 + $0x28] sm:$0xf]
        %v278 = vld [vmem:[%s211 + $0x2c] sm:$0xf]
        %v279 = vld [vmem:[%s211 + $0x30] sm:$0xf]
        %v280 = vld [vmem:[%s211 + $0x34] sm:$0xf]
        %v281 = vld [vmem:[%s211 + $0x38] sm:$0xf]
        %v282 = vld [vmem:[%s211 + $0x3c] sm:$0xf]
        %v283 = vld [vmem:[%s211 + $0x40] sm:$0xf]
        %v284 = vld [vmem:[%s211 + $0x44] sm:$0xf]
        %v285 = vld [vmem:[%s211 + $0x48] sm:$0xf]
        %v286 = vld [vmem:[%s211 + $0x4c] sm:$0xf]
        %v287 = vld [vmem:[%s211 + $0x50] sm:$0xf]
        %v288 = vld [vmem:[%s211 + $0x54] sm:$0xf]
        %v289 = vld [vmem:[%s211 + $0x58] sm:$0xf]
        %v290 = vld [vmem:[%s211 + $0x5c] sm:$0xf]
        %v291 = vld [vmem:[%s211 + $0x60] sm:$0xf]
        %v292 = vld [vmem:[%s211 + $0x64] sm:$0xf]
        %v293 = vld [vmem:[%s211 + $0x68] sm:$0xf]
        %v294 = vld [vmem:[%s211 + $0x6c] sm:$0xf]
        %v295 = vld [vmem:[%s211 + $0x70] sm:$0xf]
        %v296 = vld [vmem:[%s211 + $0x74] sm:$0xf]
        %v297 = vld [vmem:[%s211 + $0x78] sm:$0xf]
        %v298 = vld [vmem:[%s211 + $0x7c] sm:$0xf]
        %v299 = vld [vmem:[%s211 + $0x80] sm:$0xf]
        %v300 = vld [vmem:[%s211 + $0x84] sm:$0xf]
        %v301 = vld [vmem:[%s211 + $0x88] sm:$0xf]
        %v302 = vld [vmem:[%s211 + $0x8c] sm:$0xf]
        %v303 = vld [vmem:[%s211 + $0x90] sm:$0xf]
        %v304 = vld [vmem:[%s211 + $0x94] sm:$0xf]
        %v305 = vld [vmem:[%s211 + $0x98] sm:$0xf]
        %v306 = vld [vmem:[%s211 + $0x9c] sm:$0xf]
        %v307 = vld [vmem:[%s211 + $0xa0] sm:$0xf]
        %v308 = vld [vmem:[%s211 + $0xa4] sm:$0xf]
        %v309 = vld [vmem:[%s211 + $0xa8] sm:$0xf]
        %v310 = vld [vmem:[%s211 + $0xac] sm:$0xf]
        %v311 = vld [vmem:[%s211 + $0xb0] sm:$0xf]
        %v312 = vld [vmem:[%s211 + $0xb4] sm:$0xf]
        %v313 = vld [vmem:[%s211 + $0xb8] sm:$0xf]
        %v314 = vld [vmem:[%s211 + $0xbc] sm:$0xf]
        %v315 = vld [vmem:[%s211 + $0xc0] sm:$0xf]
        %v316 = vld [vmem:[%s211 + $0xc4] sm:$0xf]
        %v317 = vld [vmem:[%s211 + $0xc8] sm:$0xf]
        %v318 = vld [vmem:[%s211 + $0xcc] sm:$0xf]
        %v319 = vld [vmem:[%s211 + $0xd0] sm:$0xf]
        %v320 = vld [vmem:[%s211 + $0xd4] sm:$0xf]
        %v321 = vld [vmem:[%s211 + $0xd8] sm:$0xf]
        %v322 = vld [vmem:[%s211 + $0xdc] sm:$0xf]
        %v323 = vld [vmem:[%s211 + $0xe0] sm:$0xf]
        %v324 = vld [vmem:[%s211 + $0xe4] sm:$0xf]
        %v325 = vld [vmem:[%s211 + $0xe8] sm:$0xf]
        %v326 = vld [vmem:[%s211 + $0xec] sm:$0xf]
        %v327 = vld [vmem:[%s211 + $0xf0] sm:$0xf]
        %v328 = vld [vmem:[%s211 + $0xf4] sm:$0xf]
        %v329 = vld [vmem:[%s211 + $0xf8] sm:$0xf]
        %v330 = vld [vmem:[%s211 + $0xfc] sm:$0xf]
        %v331 = vld [vmem:[%s240] sm:$0x1]
        %v333 = vlaneseq
        %v334 = vshrl.u32 %v333, 7
        %v335 = vsub.s32 0, %v334
        %v336 = vrot.slane %v331, %v335
        %v402 = vunpack.c.l.b16 %v267
        %v403 = vunpack.c.l.b16 %v268
        %v404 = vunpack.c.l.b16 %v269
        %v405 = vunpack.c.l.b16 %v270
        %v406 = vunpack.c.l.b16 %v271
        %v407 = vunpack.c.l.b16 %v272
        %v408 = vunpack.c.l.b16 %v273
        %v409 = vunpack.c.l.b16 %v274
        %v410 = vunpack.c.l.b16 %v275
        %v411 = vunpack.c.l.b16 %v276
        %v412 = vunpack.c.l.b16 %v277
        %v413 = vunpack.c.l.b16 %v278
        %v414 = vunpack.c.l.b16 %v279
        %v415 = vunpack.c.l.b16 %v280
        %v416 = vunpack.c.l.b16 %v281
        %v417 = vunpack.c.l.b16 %v282
        %v418 = vunpack.c.l.b16 %v283
        %v419 = vunpack.c.l.b16 %v284
        %v420 = vunpack.c.l.b16 %v285
        %v421 = vunpack.c.l.b16 %v286
        %v422 = vunpack.c.l.b16 %v287
        %v423 = vunpack.c.l.b16 %v288
        %v424 = vunpack.c.l.b16 %v289
        %v425 = vunpack.c.l.b16 %v290
        %v426 = vunpack.c.l.b16 %v291
        %v427 = vunpack.c.l.b16 %v292
        %v428 = vunpack.c.l.b16 %v293
        %v429 = vunpack.c.l.b16 %v294
        %v430 = vunpack.c.l.b16 %v295
        %v431 = vunpack.c.l.b16 %v296
        %v432 = vunpack.c.l.b16 %v297
        %v433 = vunpack.c.l.b16 %v298
        %v434 = vunpack.c.l.b16 %v299
        %v435 = vunpack.c.l.b16 %v300
        %v436 = vunpack.c.l.b16 %v301
        %v437 = vunpack.c.l.b16 %v302
        %v438 = vunpack.c.l.b16 %v303
        %v439 = vunpack.c.l.b16 %v304
        %v440 = vunpack.c.l.b16 %v305
        %v441 = vunpack.c.l.b16 %v306
        %v442 = vunpack.c.l.b16 %v307
        %v443 = vunpack.c.l.b16 %v308
        %v444 = vunpack.c.l.b16 %v309
        %v445 = vunpack.c.l.b16 %v310
        %v446 = vunpack.c.l.b16 %v311
        %v447 = vunpack.c.l.b16 %v312
        %v448 = vunpack.c.l.b16 %v313
        %v449 = vunpack.c.l.b16 %v314
        %v450 = vunpack.c.l.b16 %v315
        %v451 = vunpack.c.l.b16 %v316
        %v452 = vunpack.c.l.b16 %v317
        %v453 = vunpack.c.l.b16 %v318
        %v454 = vunpack.c.l.b16 %v319
        %v455 = vunpack.c.l.b16 %v320
        %v456 = vunpack.c.l.b16 %v321
        %v457 = vunpack.c.l.b16 %v322
        %v458 = vunpack.c.l.b16 %v323
        %v459 = vunpack.c.l.b16 %v324
        %v460 = vunpack.c.l.b16 %v325
        %v461 = vunpack.c.l.b16 %v326
        %v462 = vunpack.c.l.b16 %v327
        %v463 = vunpack.c.l.b16 %v328
        %v464 = vunpack.c.l.b16 %v329
        %v465 = vunpack.c.l.b16 %v330
        %v466 = vpack.c.b16 %v403, %v402
        %v467 = vpack.c.b16 %v405, %v404
        %v468 = vpack.c.b16 %v407, %v406
        %v469 = vpack.c.b16 %v409, %v408
        %v470 = vpack.c.b16 %v411, %v410
        %v471 = vpack.c.b16 %v413, %v412
        %v472 = vpack.c.b16 %v415, %v414
        %v473 = vpack.c.b16 %v417, %v416
        %v474 = vpack.c.b16 %v419, %v418
        %v475 = vpack.c.b16 %v421, %v420
        %v476 = vpack.c.b16 %v423, %v422
        %v477 = vpack.c.b16 %v425, %v424
        %v478 = vpack.c.b16 %v427, %v426
        %v479 = vpack.c.b16 %v429, %v428
        %v480 = vpack.c.b16 %v431, %v430
        %v481 = vpack.c.b16 %v433, %v432
        %v482 = vpack.c.b16 %v435, %v434
        %v483 = vpack.c.b16 %v437, %v436
        %v484 = vpack.c.b16 %v439, %v438
        %v485 = vpack.c.b16 %v441, %v440
        %v486 = vpack.c.b16 %v443, %v442
        %v487 = vpack.c.b16 %v445, %v444
        %v488 = vpack.c.b16 %v447, %v446
        %v489 = vpack.c.b16 %v449, %v448
        %v490 = vpack.c.b16 %v451, %v450
        %v491 = vpack.c.b16 %v453, %v452
        %v492 = vpack.c.b16 %v455, %v454
        %v493 = vpack.c.b16 %v457, %v456
        %v494 = vpack.c.b16 %v459, %v458
        %v495 = vpack.c.b16 %v461, %v460
        %v496 = vpack.c.b16 %v463, %v462
        %v497 = vpack.c.b16 %v465, %v464
        %530 = vmatprep.subr.bf16.mxu0 0
        %531 = vmatpush1.bf16.msra.mxu0 %v466
        %532 = vmatprep.subr.bf16.mxu0 0
        %533 = vmatpush1.bf16.msra.mxu0 %v467
        %534 = vmatprep.subr.bf16.mxu0 0
        %535 = vmatpush1.bf16.msra.mxu0 %v468
        %536 = vmatprep.subr.bf16.mxu0 0
        %537 = vmatpush1.bf16.msra.mxu0 %v469
        %538 = vmatprep.subr.bf16.mxu0 0
        %539 = vmatpush1.bf16.msra.mxu0 %v470
        %540 = vmatprep.subr.bf16.mxu0 0
        %541 = vmatpush1.bf16.msra.mxu0 %v471
        %542 = vmatprep.subr.bf16.mxu0 0
        %543 = vmatpush1.bf16.msra.mxu0 %v472
        %544 = vmatprep.subr.bf16.mxu0 0
        %545 = vmatpush1.bf16.msra.mxu0 %v473
        %546 = vmatprep.subr.bf16.mxu0 0
        %547 = vmatpush1.bf16.msra.mxu0 %v474
        %548 = vmatprep.subr.bf16.mxu0 0
        %549 = vmatpush1.bf16.msra.mxu0 %v475
        %550 = vmatprep.subr.bf16.mxu0 0
        %551 = vmatpush1.bf16.msra.mxu0 %v476
        %552 = vmatprep.subr.bf16.mxu0 0
        %553 = vmatpush1.bf16.msra.mxu0 %v477
        %554 = vmatprep.subr.bf16.mxu0 0
        %555 = vmatpush1.bf16.msra.mxu0 %v478
        %556 = vmatprep.subr.bf16.mxu0 0
        %557 = vmatpush1.bf16.msra.mxu0 %v479
        %558 = vmatprep.subr.bf16.mxu0 0
        %559 = vmatpush1.bf16.msra.mxu0 %v480
        %560 = vmatprep.subr.bf16.mxu0 0
        %561 = vmatpush1.bf16.msra.mxu0 %v481
        %562 = vmatprep.mubr.bf16.mxu0 %v260
        %563 = vmatmul.mubr.bf16.gmra.mrb[0].mxu0 %v259
        %v564 = vpop.f32.mrb[0].mxu0
        %v565 = vadd.f32 %v336, %v564
        %v566 = vpop.f32.mrb[0].mxu0
        %v567 = vpop.f32.mrb[0].mxu0
        %v568 = vadd.f32 %v336, %v567
        %v569 = vpop.f32.mrb[0].mxu0
        %570 = vmatprep.mubr.bf16.mxu0 %v264
        %571 = vmatmul.mubr.bf16.gmra.mrb[0].mxu0 %v263
        %v572 = vpop.f32.mrb[0].mxu0
        %v573 = vadd.f32 %v336, %v572
        %v574 = vpop.f32.mrb[0].mxu0
        %v575 = vpop.f32.mrb[0].mxu0
        %v576 = vadd.f32 %v336, %v575
        %v577 = vpop.f32.mrb[0].mxu0
        %578 = vdwg.mxu0
        %579 = vmatprep.subr.bf16.mxu0 0
        %580 = vmatpush1.bf16.msra.mxu0 %v482
        %581 = vmatprep.subr.bf16.mxu0 0
        %582 = vmatpush1.bf16.msra.mxu0 %v483
        %583 = vmatprep.subr.bf16.mxu0 0
        %584 = vmatpush1.bf16.msra.mxu0 %v484
        %585 = vmatprep.subr.bf16.mxu0 0
        %586 = vmatpush1.bf16.msra.mxu0 %v485
        %587 = vmatprep.subr.bf16.mxu0 0
        %588 = vmatpush1.bf16.msra.mxu0 %v486
        %589 = vmatprep.subr.bf16.mxu0 0
        %590 = vmatpush1.bf16.msra.mxu0 %v487
        %591 = vmatprep.subr.bf16.mxu0 0
        %592 = vmatpush1.bf16.msra.mxu0 %v488
        %593 = vmatprep.subr.bf16.mxu0 0
        %594 = vmatpush1.bf16.msra.mxu0 %v489
        %595 = vmatprep.subr.bf16.mxu0 0
        %596 = vmatpush1.bf16.msra.mxu0 %v490
        %597 = vmatprep.subr.bf16.mxu0 0
        %598 = vmatpush1.bf16.msra.mxu0 %v491
        %599 = vmatprep.subr.bf16.mxu0 0
        %600 = vmatpush1.bf16.msra.mxu0 %v492
        %601 = vmatprep.subr.bf16.mxu0 0
        %602 = vmatpush1.bf16.msra.mxu0 %v493
        %603 = vmatprep.subr.bf16.mxu0 0
        %604 = vmatpush1.bf16.msra.mxu0 %v494
        %605 = vmatprep.subr.bf16.mxu0 0
        %606 = vmatpush1.bf16.msra.mxu0 %v495
        %607 = vmatprep.subr.bf16.mxu0 0
        %608 = vmatpush1.bf16.msra.mxu0 %v496
        %609 = vmatprep.subr.bf16.mxu0 0
        %610 = vmatpush1.bf16.msra.mxu0 %v497
        %611 = vmatprep.mubr.bf16.mxu0 %v262
        %612 = vmatmul.mubr.bf16.gmra.mrb[0].mxu0 %v261
        %v613 = vpop.f32.mrb[0].mxu0
        %v614 = vadd.f32 %v565, %v613
        %v615 = vpop.f32.mrb[0].mxu0
        %v616 = vpop.f32.mrb[0].mxu0
        %v617 = vadd.f32 %v568, %v616
        %v618 = vpop.f32.mrb[0].mxu0
        %619 = vmatprep.mubr.bf16.mxu0 %v266
        %620 = vmatmul.mubr.bf16.gmra.mrb[0].mxu0 %v265
        %v621 = vpop.f32.mrb[0].mxu0
        %v622 = vadd.f32 %v573, %v621
        %v623 = vpop.f32.mrb[0].mxu0
        %v624 = vpop.f32.mrb[0].mxu0
        %v625 = vadd.f32 %v576, %v624
        %v626 = vpop.f32.mrb[0].mxu0
        %627 = vdwg.mxu0
        %628 = vst [vmem:[%s236] sm:$0xff] %v614
        %629 = vst [vmem:[%s236 + $0x8] sm:$0xff] %v617
        %630 = vst [vmem:[%s236 + $0x10] sm:$0xff] %v622
        %631 = vst [vmem:[%s236 + $0x18] sm:$0xff] %v625
        %s632 = sand.u32 %s121, 1
        %s633 = scalar_lea.sflag [#allocation4], %s632
        %s634 = sand.u32 %s121, 1
        %s635 = smul.addr %s634, 32
        %s636 = scalar_lea.vmem [#allocation7], %s635
        // Predicated region
        $region41: #{_linear_pallas.1} parent=31 // pred_check
          %p637 = pneg %p131
        $region42: #{_linear_pallas.1} parent=31 // pred_check_branch
          %639 = sbr.rel (%p637) target = $region44
        $region43: #{_linear_pallas.1} parent=31 // pred_region
          %s640 = smul.u32 4, %s25
          %s642 = ssub.s32 512, 512
          %643 = vsyncadd %s633, %s642
          %s644 = smul.addr %s640, 2
          %s645 = sadd.s32 %s26, %s644
          %s646 = smul.addr %s645, 128
          %s647 = scalar_lea.hbm %s3, %s646
          %s648 = sshll.u32 %s636, 4
          %s649 = int_to_ptr.vmem [resolvable:$true] %s648
          %654 = dma.vmem_to_hbm [thread:$0]  %s649, 512, %s647, %s633, 128, 256, 8
        $region44: #{_linear_pallas.1} parent=31 // pred_fallthru
          _
      $region32: #{_linear_pallas.1} parent=5 // pred_fallthru
        _
      %p655 = scmp.le.s32.totalorder 2, %s16
      // Predicated region
      $region45: #{_linear_pallas.1} parent=5 // pred_check
        %p656 = pneg %p655
      $region46: #{_linear_pallas.1} parent=5 // pred_check_branch
        %658 = sbr.rel (%p656) target = $region48
      $region47: #{_linear_pallas.1} parent=5 // pred_region
        %s659 = ssub.s32 %s16, 2
        // Predicated region
        $region49: #{_linear_pallas.1} parent=47 // pred_check
          %p660 = pneg %p137
        $region50: #{_linear_pallas.1} parent=47 // pred_check_branch
          %662 = sbr.rel (%p660) target = $region52
        $region51: #{_linear_pallas.1} parent=47 // pred_region
          %s663 = sand.u32 %s122, 1
          %s664 = scalar_lea.sflag [#allocation4], %s663
          %s665 = sand.u32 %s122, 1
          %s666 = smul.addr %s665, 32
          %s667 = scalar_lea.vmem [#allocation7], %s666
          %668 = dma.done %s664, 512
        $region52: #{_linear_pallas.1} parent=47 // pred_fallthru
          _
      $region48: #{_linear_pallas.1} parent=5 // pred_fallthru
        _
    $region6: #{_linear_pallas.1} parent=1 // loop_footer
      %s20 = sadd.s32 1, %s16
    $region7: #{_linear_pallas.1} parent=1 // loop_footer_branch
      %15 = sbr.rel target = $region3
    $region8: #{_linear_pallas.1} parent=1 // loop_exit
      _
    %669 = vsyncpa [#allocation3], 1
    %s670 = scalar_lea.sflag [#allocation3], 1
    %671 = vsyncpa %s670, 1
    %672 = vsyncpa [#allocation6], 1
    %s673 = scalar_lea.sflag [#allocation6], 1
    %674 = vsyncpa %s673, 1
    %675 = vsyncpa [#allocation4], 1
    %s676 = scalar_lea.sflag [#allocation4], 1
    %677 = vsyncpa %s676, 1

</llo_original>
